<compile_context>
chip_gen: v7x
topology: tpu7x:2x2x1
jax: 0.10.0
libtpu: 0.0.40
codegen_flags: <defaults>
</compile_context>

<pallas_src>
import functools

import jax
import jax.numpy as jnp
from jax import lax
from jax.experimental import pallas as pl
from jax.experimental.pallas import tpu as pltpu


def _round_up(a, b):
    return ((a + b - 1) // b) * b


def _vmem_caps():
    """Generation-aware VMEM budgets: (working-set target, scoped-vmem ceiling)."""
    cap = 64 * 1024 * 1024                      # v7x-safe fallback (64 MiB physical)
    try:
        info = pltpu.get_tpu_info()
        cap = int(getattr(info, "vmem_capacity_bytes", cap)) or cap
    except Exception:
        pass
    return int(cap * 0.45), int(cap * 0.70)


# --------------------------------------------------------------------------------------
# Per-M-tile kernel: nearest code, quantize, per-tile masked partial sums.
# --------------------------------------------------------------------------------------
def _vq_tile_kernel(x_ref, m_ref, e_ref, esq_ref,
                    q_ref, ind_ref, cnt_ref, part_ref,
                    *, m_total, mm_dtype):
    tm = x_ref.shape[0]
    K = e_ref.shape[0]

    # ---- row-validity mask for the (possibly partial) last M tile ----
    row = pl.program_id(0) * tm + lax.broadcasted_iota(jnp.int32, (tm, 1), 0)
    valid = row < m_total                                              # (TM, 1) bool

    x32 = jnp.where(valid, x_ref[...].astype(jnp.float32), 0.0)       # (TM, D) f32
    m = jnp.where(valid, m_ref[...], 0.0)                             # (TM, 1) f32
    e = e_ref[...]                                                     # (K, D) mm_dtype, resident
    esq = esq_ref[...]                                                 # (1, K) f32, resident

    # ---- scores (MXU, NT form): s = x E^T - 0.5||e||^2 ; argmax(s) == argmax(-||x-e||^2)
    s = lax.dot_general(x32.astype(mm_dtype), e, (((1,), (1,)), ((), ())),
                        preferred_element_type=jnp.float32)            # (TM, K)
    s = s - 0.5 * esq

    # ---- nearest code ----
    idx = jnp.argmax(s, axis=-1, keepdims=True).astype(jnp.int32)      # (TM, 1)
    ind_ref[...] = idx

    # one-hot from a (1,K) iota broadcast against idx (no (TM,K) int32 iota temporary)
    k_iota = lax.broadcasted_iota(jnp.int32, (1, K), 1)
    onehot = (k_iota == idx).astype(jnp.float32)                       # (TM, K)

    # ---- quantize = embedding lookup == onehot @ E (MXU), f32 accumulate ----
    q = lax.dot_general(onehot.astype(mm_dtype), e, (((1,), (0,)), ((), ())),
                        preferred_element_type=jnp.float32)            # (TM, D)
    q_ref[...] = q.astype(q_ref.dtype)                                 # native dtype / width D

    # ---- per-tile masked code counts (perplexity numerator), lane-dense (1,1,K) ----
    cnt_ref[...] = jnp.sum(onehot * m, axis=0).reshape(1, 1, K)

    # ---- per-tile masked squared-distance partials: ||x - e_idx||^2 computed directly ----
    d = x32 - q
    sq = jnp.sum(d * d, axis=-1, keepdims=True)                        # (TM, 1)
    sum_sq_m = jnp.sum(sq * m)
    sum_m = jnp.sum(m)
    lane = lax.broadcasted_iota(jnp.int32, (1, 1, 128), 2)
    part_ref[...] = jnp.where(lane == 0, sum_sq_m,
                              jnp.where(lane == 1, sum_m, 0.0)).astype(jnp.float32)


# --------------------------------------------------------------------------------------
# Orthogonal-regularization kernel, tiled over codebook rows (never builds full (K,K) cos).
# --------------------------------------------------------------------------------------
def _ortho_tile_kernel(nblk_ref, nall_ref, part_ref, *, k_total):
    tk = nblk_ref.shape[0]
    row = pl.program_id(0) * tk + lax.broadcasted_iota(jnp.int32, (tk, 1), 0)
    valid = row < k_total
    blk = jnp.where(valid, nblk_ref[...], 0.0)                         # (TK, D) l2-normed rows
    alln = nall_ref[...]                                               # (K, D)  l2-normed, resident
    cos = lax.dot_general(blk, alln, (((1,), (1,)), ((), ())),
                          preferred_element_type=jnp.float32)          # (TK, K)
    sumsq = jnp.sum(cos * cos)
    trace = jnp.sum(blk * blk)          # == sum_i ||normed_i||^2 over this row block (diag terms)
    lane = lax.broadcasted_iota(jnp.int32, (1, 1, 128), 2)
    part_ref[...] = jnp.where(lane == 0, sumsq,
                              jnp.where(lane == 1, trace, 0.0)).astype(jnp.float32)


# --------------------------------------------------------------------------------------
# Wrapper
# --------------------------------------------------------------------------------------
@functools.partial(jax.jit, static_argnames=("vq_loss_weight", "commitment_weight",
                                             "orthogonal_reg_weight", "block_m",
                                             "use_bf16_matmul"))
def vector_quantize_forward(x, node_mask, embed,
                            vq_loss_weight=1.0, commitment_weight=1.0,
                            orthogonal_reg_weight=0.1, block_m=1024,
                            use_bf16_matmul=None):
    """Eval-mode VectorQuantize.forward.

    x:         (B, N, D) float (f32 or bf16; quantize is returned in x.dtype)
    node_mask: (B, N)    float/bool (1 = valid node)
    embed:     (K, D)    float codebook
    Loss weights / block_m / use_bf16_matmul are static (trace-time branching).
    use_bf16_matmul=None -> follow x.dtype (bf16 MXU iff x is bf16).
    """
    B, N, D = x.shape
    K = embed.shape[0]
    M = B * N

    if use_bf16_matmul is None:
        use_bf16 = (x.dtype == jnp.bfloat16)
    else:
        use_bf16 = bool(use_bf16_matmul)
    mm_dtype = jnp.bfloat16 if use_bf16 else jnp.float32

    x_bytes = jnp.dtype(x.dtype).itemsize
    mm_bytes = jnp.dtype(mm_dtype).itemsize
    work_cap, limit_cap = _vmem_caps()

    # ---- M-tile sizing: biggest MXU-friendly tile that fits the generation's VMEM budget ----
    def _tile_bytes(tm):
        return (2 * tm * D * x_bytes          # x tiles (double-buffered)
                + 2 * tm * D * x_bytes        # quantize tiles (double-buffered)
                + 2 * K * D * mm_bytes        # resident codebook buffers
                + 2 * K * 4                   # ||e||^2
                + 5 * tm * K * 4              # scores / one-hot / casts (in-kernel temps)
                + 32 * tm)                    # mask / idx / iota / partials

    TM = max(int(block_m), 8)
    TM = (TM // 128) * 128 if TM >= 128 else _round_up(TM, 8)
    while TM > 256 and _tile_bytes(TM) > work_cap:
        TM = max(((TM // 2) // 128) * 128, 256)
    TM = min(TM, _round_up(M, 8))
    num_tiles = pl.cdiv(M, TM)
    vmem_limit = int(min(max(2 * _tile_bytes(TM), 32 << 20), limit_cap))

    # ---- flatten without padded copies (no lane padding, no M padding) ----
    x_flat = x.reshape(M, D)                                           # free reshape
    m_flat = node_mask.reshape(M, 1).astype(jnp.float32)
    embed_f32 = embed.astype(jnp.float32)
    embed_mm = embed.astype(mm_dtype)
    e_sq = jnp.sum(embed_f32 * embed_f32, axis=-1)                     # (K,)
    esq_row = e_sq[None, :]                                            # (1, K)

    out_shapes = (
        jax.ShapeDtypeStruct((M, D), x.dtype),                         # quantize (native dtype)
        jax.ShapeDtypeStruct((M, 1), jnp.int32),                       # embed_ind
        jax.ShapeDtypeStruct((num_tiles, 1, K), jnp.float32),          # masked code counts / tile
        jax.ShapeDtypeStruct((num_tiles, 1, 128), jnp.float32),        # [sum(sq*m), sum(m), 0...]
    )

    q_flat, ind_flat, cnt_tiles, part_tiles = pl.pallas_call(
        functools.partial(_vq_tile_kernel, m_total=M, mm_dtype=mm_dtype),
        out_shape=out_shapes,
        grid=(num_tiles,),
        in_specs=[
            pl.BlockSpec((TM, D), lambda i: (i, 0)),                   # x tile (native width D)
            pl.BlockSpec((TM, 1), lambda i: (i, 0)),                   # mask tile
            pl.BlockSpec((K, D), lambda i: (0, 0)),                    # codebook, VMEM-resident
            pl.BlockSpec((1, K), lambda i: (0, 0)),                    # ||e||^2, resident
        ],
        out_specs=(
            pl.BlockSpec((TM, D), lambda i: (i, 0)),
            pl.BlockSpec((TM, 1), lambda i: (i, 0)),
            pl.BlockSpec((1, 1, K), lambda i: (i, 0, 0)),
            pl.BlockSpec((1, 1, 128), lambda i: (i, 0, 0)),
        ),
        compiler_params=pltpu.CompilerParams(
            dimension_semantics=("parallel",),
            vmem_limit_bytes=vmem_limit),
    )(x_flat, m_flat, embed_mm, esq_row)

    quantize = q_flat.reshape(B, N, D)
    embed_ind = ind_flat[:, 0].reshape(B, N)

    # ---- reduce per-tile partials (trivial XLA work) ----
    counts = jnp.sum(cnt_tiles[:, 0, :], axis=0)                       # (K,) masked code usage
    avg_probs = counts / jnp.float32(M)                                # reference divides by B*N
    perplexity = jnp.exp(-jnp.sum(avg_probs * jnp.log(avg_probs + 1e-10)))

    sum_sq_m = jnp.sum(part_tiles[:, 0, 0])
    sum_m = jnp.sum(part_tiles[:, 0, 1])
    sq_mean = jnp.where(sum_m > 0, sum_sq_m / jnp.maximum(sum_m, 1e-12), 0.0)  # all-masked guard

    # ---- codebook-only terms ----
    embed_norm = jnp.sqrt(e_sq)                                        # (K,) ||E_k||_2

    if orthogonal_reg_weight > 0:
        normed = embed_f32 / jnp.maximum(embed_norm[:, None], 1e-12)   # F.normalize eps

        def _ortho_bytes(tk):
            return 2 * tk * D * 4 + 2 * K * D * 4 + 3 * tk * K * 4 + 64 * tk

        TK = 512
        while TK > 64 and _ortho_bytes(TK) > work_cap:
            TK //= 2
        TK = min(_round_up(TK, 8), _round_up(K, 8))
        nkt = pl.cdiv(K, TK)
        ortho_vmem = int(min(max(2 * _ortho_bytes(TK), 16 << 20), limit_cap))

        ortho_parts = pl.pallas_call(
            functools.partial(_ortho_tile_kernel, k_total=K),
            out_shape=jax.ShapeDtypeStruct((nkt, 1, 128), jnp.float32),
            grid=(nkt,),
            in_specs=[
                pl.BlockSpec((TK, D), lambda i: (i, 0)),               # row block of normed codes
                pl.BlockSpec((K, D), lambda i: (0, 0)),                # full normed codebook, resident
            ],
            out_specs=pl.BlockSpec((1, 1, 128), lambda i: (i, 0, 0)),
            compiler_params=pltpu.CompilerParams(
                dimension_semantics=("parallel",),
                vmem_limit_bytes=ortho_vmem),
        )(normed, normed)
        sum_cos_sq = jnp.sum(ortho_parts[:, 0, 0])
        trace_cos = jnp.sum(ortho_parts[:, 0, 1])
        # ||cos - I||_F^2 = sum(cos^2) - 2*trace(cos) + K   (no (K,K) identity materialized)
        ortho = (sum_cos_sq - 2.0 * trace_cos + jnp.float32(K)) / jnp.float32(K * K)
    else:
        ortho = jnp.float32(0.0)

    # ---- loss assembly (weights are static -> Python branching like the module) ----
    vq_l = sq_mean if vq_loss_weight > 0 else jnp.float32(0.0)
    commit_l = sq_mean if commitment_weight > 0 else jnp.float32(0.0)
    total = (vq_l * vq_loss_weight
             + commit_l * commitment_weight
             + ortho * orthogonal_reg_weight)

    vq_loss = {
        'loss': jnp.reshape(total, (1,)),
        'vq_loss': vq_l,
        'commit_loss': commit_l,
        'orthogonal_reg_loss': ortho,
        'codebook_embed_norm': embed_norm,
    }
    return quantize, embed_ind, vq_loss, perplexity


# --------------------------------------------------------------------------------------
# Plain-JAX reference of the same eval-mode forward (for verification)
# --------------------------------------------------------------------------------------
def _reference_forward(x, node_mask, embed):
    B, N, D = x.shape
    K = embed.shape[0]
    x = x.astype(jnp.float32)
    embed = embed.astype(jnp.float32)
    node_mask = node_mask.astype(jnp.float32)
    flatten = x.reshape(-1, D)
    m = node_mask.reshape(-1, 1)
    dist = -(jnp.sum(flatten ** 2, 1, keepdims=True)
             - 2 * flatten @ embed.T
             + jnp.sum(embed ** 2, 1)[None, :])
    idx = jnp.argmax(dist, axis=-1)
    onehot = jax.nn.one_hot(idx, K, dtype=jnp.float32) * m
    quantize = embed[idx].reshape(B, N, D)
    avg = jnp.mean(onehot, axis=0)
    perplexity = jnp.exp(-jnp.sum(avg * jnp.log(avg + 1e-10)))
    sq = jnp.sum((quantize - x) ** 2, axis=-1)
    vq_l = jnp.sum(sq * node_mask) / jnp.sum(node_mask)
    normed = embed / jnp.maximum(jnp.linalg.norm(embed, axis=-1, keepdims=True), 1e-12)
    cos = normed @ normed.T
    ortho = jnp.sum((cos - jnp.eye(K)) ** 2) / (K * K)
    enorm = jnp.linalg.norm(embed, axis=-1)
    return quantize, idx.reshape(B, N), vq_l, ortho, perplexity, enorm


def _check_f32(x, node_mask, embed, block_m):
    quantize, embed_ind, vq_loss, perplexity = vector_quantize_forward(
        x, node_mask, embed, block_m=block_m)
    jax.block_until_ready((quantize, embed_ind, vq_loss['loss'], perplexity))
    q_ref, ind_ref, vq_ref, ortho_ref, perp_ref, enorm_ref = _reference_forward(
        x, node_mask, embed)
    assert quantize.dtype == x.dtype
    assert jnp.allclose(quantize.astype(jnp.float32), q_ref, atol=1e-4), "quantize mismatch"
    assert jnp.array_equal(embed_ind, ind_ref), "embed_ind mismatch"
    assert jnp.allclose(vq_loss['vq_loss'], vq_ref, atol=1e-4, rtol=1e-4), "vq_loss mismatch"
    assert jnp.allclose(vq_loss['orthogonal_reg_loss'], ortho_ref, atol=1e-4), "ortho mismatch"
    assert jnp.allclose(perplexity, perp_ref, atol=1e-4), "perplexity mismatch"
    assert jnp.allclose(vq_loss['codebook_embed_norm'], enorm_ref, atol=1e-4), "embed_norm mismatch"


def _check_bf16(x, node_mask, embed, block_m):
    # bf16 inputs -> bf16 MXU operands / bf16 quantize writeback; tolerant checks
    # (near-tie argmax may legitimately differ from the f32 reference).
    xb = x.astype(jnp.bfloat16)
    eb = embed.astype(jnp.bfloat16)
    quantize, embed_ind, vq_loss, perplexity = vector_quantize_forward(
        xb, node_mask, eb, block_m=block_m)
    jax.block_until_ready((quantize, embed_ind, vq_loss['loss'], perplexity))
    assert quantize.dtype == jnp.bfloat16
    # quantize must be exactly the looked-up bf16 codebook rows of the reported indices
    assert jnp.array_equal(quantize, eb[embed_ind]), "bf16 quantize/index self-consistency"
    # indices must be (near-)optimal under exact f32 distances of the bf16 values
    B, N, D = x.shape
    xf = xb.astype(jnp.float32).reshape(-1, D)
    ef = eb.astype(jnp.float32)
    dist = (jnp.sum(xf ** 2, 1, keepdims=True) - 2 * xf @ ef.T
            + jnp.sum(ef ** 2, 1)[None, :])
    d_sel = jnp.take_along_axis(dist, embed_ind.reshape(-1, 1), axis=1)[:, 0]
    d_min = jnp.min(dist, axis=-1)
    assert bool(jnp.all(d_sel <= d_min + 0.5)), "bf16 nearest-code selection too far off"
    assert bool(jnp.isfinite(perplexity)), "bf16 perplexity not finite"
    assert bool(jnp.all(jnp.isfinite(vq_loss['loss']))), "bf16 loss not finite"


if __name__ == "__main__":
    key = jax.random.PRNGKey(0)

    # Test 1: small shapes, single M-tile (B=2, N=8, D=32, K=128)
    B, N, D, K = 2, 8, 32, 128
    k1, k2, key = jax.random.split(key, 3)
    x = jax.random.normal(k1, (B, N, D), dtype=jnp.float32)
    embed = jax.random.normal(k2, (K, D), dtype=jnp.float32)
    lengths = jnp.array([8, 5])
    node_mask = (jnp.arange(N)[None, :] < lengths[:, None]).astype(jnp.float32)
    _check_f32(x, node_mask, embed, block_m=1024)

    # Test 2: same data, forced small tile -> multi-tile grid + partial-sum reduction
    _check_f32(x, node_mask, embed, block_m=8)

    # Test 3: ragged M (B=2, N=13 -> M=26) with tile 8 -> partial last block (masked rows)
    B2, N2 = 2, 13
    k3, k4, key = jax.random.split(key, 3)
    x2 = jax.random.normal(k3, (B2, N2, D), dtype=jnp.float32)
    embed2 = jax.random.normal(k4, (K, D), dtype=jnp.float32)
    lengths2 = jnp.array([13, 9])
    node_mask2 = (jnp.arange(N2)[None, :] < lengths2[:, None]).astype(jnp.float32)
    _check_f32(x2, node_mask2, embed2, block_m=8)

    # Test 4: bf16 inputs -> bf16 MXU matmuls and bf16 quantize writeback
    _check_bf16(x2, node_mask2, embed2, block_m=8)

    print("KERNEL_OK")
</pallas_src>

<mosaic_0001>
module attributes {stable_mosaic.version = 11 : i64} {
  func.func @_vq_tile_kernel(%arg0: i32, %arg1: memref<16x32xf32, #tpu.memory_space<vmem>>, %arg2: memref<16x1xf32, #tpu.memory_space<vmem>>, %arg3: memref<128x32xf32, #tpu.memory_space<vmem>>, %arg4: memref<1x128xf32, #tpu.memory_space<vmem>>, %arg5: memref<16x32xf32, #tpu.memory_space<vmem>>, %arg6: memref<16x1xi32, #tpu.memory_space<vmem>>, %arg7: memref<1x1x128xf32, #tpu.memory_space<vmem>>, %arg8: memref<1x1x128xf32, #tpu.memory_space<vmem>>) attributes {dimension_semantics = [#tpu.dimension_semantics<parallel>], iteration_bounds = array<i64: 1>, scalar_prefetch = 0 : i64, scratch_operands = 0 : i64, tpu.core_type = #tpu.core_type<tc>, window_params = [{transform_indices = @transform_0, window_bounds = array<i64: 16, 32>}, {transform_indices = @transform_1, window_bounds = array<i64: 16, 1>}, {pipeline_mode = #tpu.pipeline_mode<synchronous>, transform_indices = @transform_2, window_bounds = array<i64: 128, 32>}, {pipeline_mode = #tpu.pipeline_mode<synchronous>, transform_indices = @transform_3, window_bounds = array<i64: 1, 128>}, {transform_indices = @transform_4, window_bounds = array<i64: 16, 32>}, {transform_indices = @transform_5, window_bounds = array<i64: 16, 1>}, {transform_indices = @transform_6, window_bounds = array<i64: 1, 1, 128>}, {transform_indices = @transform_7, window_bounds = array<i64: 1, 1, 128>}]} {
    %c16_i32 = arith.constant 16 : i32
    %0 = arith.muli %arg0, %c16_i32 : i32
    %1 = tpu.iota {dimensions = array<i32: 0>} : vector<16x1xi32>
    %2 = vector.broadcast %0 : i32 to vector<16x1xi32>
    %3 = arith.addi %2, %1 : vector<16x1xi32>
    %c16_i32_0 = arith.constant 16 : i32
    %4 = vector.broadcast %c16_i32_0 : i32 to vector<16x1xi32>
    %5 = arith.cmpi slt, %3, %4 : vector<16x1xi32>
    %c0 = arith.constant 0 : index
    %c0_1 = arith.constant 0 : index
    %6 = vector.load %arg1[%c0, %c0_1] : memref<16x32xf32, #tpu.memory_space<vmem>>, vector<16x32xf32>
    %cst = arith.constant 0.000000e+00 : f32
    %7 = vector.shape_cast %5 : vector<16x1xi1> to vector<16x1xi1>
    %8 = vector.broadcast %7 : vector<16x1xi1> to vector<16x32xi1>
    %9 = vector.broadcast %cst : f32 to vector<16x32xf32>
    %10 = arith.select %8, %6, %9 : vector<16x32xi1>, vector<16x32xf32>
    %c0_2 = arith.constant 0 : index
    %c0_3 = arith.constant 0 : index
    %11 = vector.load %arg2[%c0_2, %c0_3] : memref<16x1xf32, #tpu.memory_space<vmem>>, vector<16x1xf32>
    %cst_4 = arith.constant 0.000000e+00 : f32
    %12 = vector.broadcast %cst_4 : f32 to vector<16x1xf32>
    %13 = arith.select %5, %11, %12 : vector<16x1xi1>, vector<16x1xf32>
    %c0_5 = arith.constant 0 : index
    %c0_6 = arith.constant 0 : index
    %14 = vector.load %arg3[%c0_5, %c0_6] : memref<128x32xf32, #tpu.memory_space<vmem>>, vector<128x32xf32>
    %c0_7 = arith.constant 0 : index
    %c0_8 = arith.constant 0 : index
    %15 = vector.load %arg4[%c0_7, %c0_8] : memref<1x128xf32, #tpu.memory_space<vmem>>, vector<1x128xf32>
    %cst_9 = arith.constant dense<0.000000e+00> : vector<16x128xf32>
    %16 = tpu.matmul %10, %14, %cst_9 {dimension_numbers = #tpu.dot_dimension_numbers<[1], [1], [0], [0], [0, 0, 1, 0], [], []>} : vector<16x32xf32>, vector<128x32xf32>, vector<16x128xf32> -> vector<16x128xf32>
    %cst_10 = arith.constant 5.000000e-01 : f32
    %17 = vector.broadcast %cst_10 : f32 to vector<1x128xf32>
    %18 = arith.mulf %17, %15 : vector<1x128xf32>
    %19 = vector.broadcast %18 : vector<1x128xf32> to vector<16x128xf32>
    %20 = arith.subf %16, %19 : vector<16x128xf32>
    %21 = tpu.reduce_index %20 {axis = 1 : i32, kind = #tpu.reduction_kind<arg_max>} : vector<16x128xf32> -> vector<16xi32>
    %22 = vector.shape_cast %21 : vector<16xi32> to vector<16x1xi32>
    %c0_11 = arith.constant 0 : index
    %c0_12 = arith.constant 0 : index
    %23 = vector.load %arg6[%c0_11, %c0_12] : memref<16x1xi32, #tpu.memory_space<vmem>>, vector<16x1xi32>
    tpu.vector_store %arg6[%c0_11, %c0_12], %22 {strides = array<i32>} : memref<16x1xi32, #tpu.memory_space<vmem>>, vector<16x1xi32>,
    %24 = tpu.iota {dimensions = array<i32: 1>} : vector<1x128xi32>
    %25 = vector.broadcast %24 : vector<1x128xi32> to vector<16x128xi32>
    %26 = vector.broadcast %22 : vector<16x1xi32> to vector<16x128xi32>
    %27 = arith.cmpi eq, %25, %26 : vector<16x128xi32>
    %28 = arith.extui %27 : vector<16x128xi1> to vector<16x128xi32>
    %29 = arith.sitofp %28 : vector<16x128xi32> to vector<16x128xf32>
    %cst_13 = arith.constant dense<0.000000e+00> : vector<16x32xf32>
    %30 = tpu.matmul %29, %14, %cst_13 {dimension_numbers = #tpu.dot_dimension_numbers<[1], [0], [0], [1], [0, 0, 1, 1], [], []>} : vector<16x128xf32>, vector<128x32xf32>, vector<16x32xf32> -> vector<16x32xf32>
    %c0_14 = arith.constant 0 : index
    %c0_15 = arith.constant 0 : index
    %31 = vector.load %arg5[%c0_14, %c0_15] : memref<16x32xf32, #tpu.memory_space<vmem>>, vector<16x32xf32>
    tpu.vector_store %arg5[%c0_14, %c0_15], %30 {strides = array<i32>} : memref<16x32xf32, #tpu.memory_space<vmem>>, vector<16x32xf32>,
    %32 = vector.broadcast %13 : vector<16x1xf32> to vector<16x128xf32>
    %33 = arith.mulf %29, %32 : vector<16x128xf32>
    %cst_16 = arith.constant dense<0.000000e+00> : vector<128xf32>
    %34 = vector.multi_reduction <add>, %33, %cst_16 [0] : vector<16x128xf32> to vector<128xf32>
    %35 = vector.shape_cast %34 : vector<128xf32> to vector<1x1x128xf32>
    %c0_17 = arith.constant 0 : index
    %c0_18 = arith.constant 0 : index
    %c0_19 = arith.constant 0 : index
    %36 = vector.load %arg7[%c0_17, %c0_18, %c0_19] : memref<1x1x128xf32, #tpu.memory_space<vmem>>, vector<1x1x128xf32>
    tpu.vector_store %arg7[%c0_17, %c0_18, %c0_19], %35 {strides = array<i32>} : memref<1x1x128xf32, #tpu.memory_space<vmem>>, vector<1x1x128xf32>,
    %37 = arith.subf %10, %30 : vector<16x32xf32>
    %38 = arith.mulf %37, %37 : vector<16x32xf32>
    %cst_20 = arith.constant dense<0.000000e+00> : vector<16xf32>
    %39 = vector.multi_reduction <add>, %38, %cst_20 [1] : vector<16x32xf32> to vector<16xf32>
    %40 = vector.shape_cast %39 : vector<16xf32> to vector<16x1xf32>
    %41 = arith.mulf %40, %13 : vector<16x1xf32>
    %42 = vector.shape_cast %41 : vector<16x1xf32> to vector<1x16x1xf32>
    %cst_21 = arith.constant dense<0.000000e+00> : vector<1xf32>
    %43 = vector.multi_reduction <add>, %42, %cst_21 [1, 2] : vector<1x16x1xf32> to vector<1xf32>
    %44 = vector.shape_cast %43 : vector<1xf32> to vector<1x1x1xf32>
    %45 = vector.extract %44[0, 0, 0] : f32 from vector<1x1x1xf32>
    %46 = vector.shape_cast %13 : vector<16x1xf32> to vector<1x16x1xf32>
    %cst_22 = arith.constant dense<0.000000e+00> : vector<1xf32>
    %47 = vector.multi_reduction <add>, %46, %cst_22 [1, 2] : vector<1x16x1xf32> to vector<1xf32>
    %48 = vector.shape_cast %47 : vector<1xf32> to vector<1x1x1xf32>
    %49 = vector.extract %48[0, 0, 0] : f32 from vector<1x1x1xf32>
    %50 = tpu.iota {dimensions = array<i32: 2>} : vector<1x1x128xi32>
    %c0_i32 = arith.constant 0 : i32
    %51 = vector.broadcast %c0_i32 : i32 to vector<1x1x128xi32>
    %52 = arith.cmpi eq, %50, %51 : vector<1x1x128xi32>
    %c1_i32 = arith.constant 1 : i32
    %53 = vector.broadcast %c1_i32 : i32 to vector<1x1x128xi32>
    %54 = arith.cmpi eq, %50, %53 : vector<1x1x128xi32>
    %cst_23 = arith.constant 0.000000e+00 : f32
    %55 = vector.broadcast %49 : f32 to vector<1x1x128xf32>
    %56 = vector.broadcast %cst_23 : f32 to vector<1x1x128xf32>
    %57 = arith.select %54, %55, %56 : vector<1x1x128xi1>, vector<1x1x128xf32>
    %58 = vector.broadcast %45 : f32 to vector<1x1x128xf32>
    %59 = arith.select %52, %58, %57 : vector<1x1x128xi1>, vector<1x1x128xf32>
    %c0_24 = arith.constant 0 : index
    %c0_25 = arith.constant 0 : index
    %c0_26 = arith.constant 0 : index
    %60 = vector.load %arg8[%c0_24, %c0_25, %c0_26] : memref<1x1x128xf32, #tpu.memory_space<vmem>>, vector<1x1x128xf32>
    tpu.vector_store %arg8[%c0_24, %c0_25, %c0_26], %59 {strides = array<i32>} : memref<1x1x128xf32, #tpu.memory_space<vmem>>, vector<1x1x128xf32>,
    return
  }
  func.func @transform_0(%arg0: i32) -> (i32, i32) {
    %c0_i32 = arith.constant 0 : i32
    %c0_i32_0 = arith.constant 0 : i32
    return %arg0, %c0_i32 : i32, i32
  }
  func.func @transform_1(%arg0: i32) -> (i32, i32) {
    %c0_i32 = arith.constant 0 : i32
    %c0_i32_0 = arith.constant 0 : i32
    return %arg0, %c0_i32 : i32, i32
  }
  func.func @transform_2(%arg0: i32) -> (i32, i32) {
    %c0_i32 = arith.constant 0 : i32
    %c0_i32_0 = arith.constant 0 : i32
    %c0_i32_1 = arith.constant 0 : i32
    return %c0_i32, %c0_i32_0 : i32, i32
  }
  func.func @transform_3(%arg0: i32) -> (i32, i32) {
    %c0_i32 = arith.constant 0 : i32
    %c0_i32_0 = arith.constant 0 : i32
    %c0_i32_1 = arith.constant 0 : i32
    return %c0_i32, %c0_i32_0 : i32, i32
  }
  func.func @transform_4(%arg0: i32) -> (i32, i32) {
    %c0_i32 = arith.constant 0 : i32
    %c0_i32_0 = arith.constant 0 : i32
    return %arg0, %c0_i32 : i32, i32
  }
  func.func @transform_5(%arg0: i32) -> (i32, i32) {
    %c0_i32 = arith.constant 0 : i32
    %c0_i32_0 = arith.constant 0 : i32
    return %arg0, %c0_i32 : i32, i32
  }
  func.func @transform_6(%arg0: i32) -> (i32, i32, i32) {
    %c0_i32 = arith.constant 0 : i32
    %c0_i32_0 = arith.constant 0 : i32
    %c0_i32_1 = arith.constant 0 : i32
    return %arg0, %c0_i32, %c0_i32_0 : i32, i32, i32
  }
  func.func @transform_7(%arg0: i32) -> (i32, i32, i32) {
    %c0_i32 = arith.constant 0 : i32
    %c0_i32_0 = arith.constant 0 : i32
    %c0_i32_1 = arith.constant 0 : i32
    return %arg0, %c0_i32, %c0_i32_0 : i32, i32, i32
  }
}

module attributes {stable_mosaic.version = 11 : i64} {
  func.func @_ortho_tile_kernel(%arg0: i32, %arg1: memref<128x32xf32, #tpu.memory_space<vmem>>, %arg2: memref<128x32xf32, #tpu.memory_space<vmem>>, %arg3: memref<1x1x128xf32, #tpu.memory_space<vmem>>) attributes {dimension_semantics = [#tpu.dimension_semantics<parallel>], iteration_bounds = array<i64: 1>, scalar_prefetch = 0 : i64, scratch_operands = 0 : i64, tpu.core_type = #tpu.core_type<tc>, window_params = [{transform_indices = @transform_0, window_bounds = array<i64: 128, 32>}, {pipeline_mode = #tpu.pipeline_mode<synchronous>, transform_indices = @transform_1, window_bounds = array<i64: 128, 32>}, {transform_indices = @transform_2, window_bounds = array<i64: 1, 1, 128>}]} {
    %c128_i32 = arith.constant 128 : i32
    %0 = arith.muli %arg0, %c128_i32 : i32
    %1 = tpu.iota {dimensions = array<i32: 0>} : vector<128x1xi32>
    %2 = vector.broadcast %0 : i32 to vector<128x1xi32>
    %3 = arith.addi %2, %1 : vector<128x1xi32>
    %c128_i32_0 = arith.constant 128 : i32
    %4 = vector.broadcast %c128_i32_0 : i32 to vector<128x1xi32>
    %5 = arith.cmpi slt, %3, %4 : vector<128x1xi32>
    %c0 = arith.constant 0 : index
    %c0_1 = arith.constant 0 : index
    %6 = vector.load %arg1[%c0, %c0_1] : memref<128x32xf32, #tpu.memory_space<vmem>>, vector<128x32xf32>
    %cst = arith.constant 0.000000e+00 : f32
    %7 = vector.shape_cast %5 : vector<128x1xi1> to vector<128x1xi1>
    %8 = vector.broadcast %7 : vector<128x1xi1> to vector<128x32xi1>
    %9 = vector.broadcast %cst : f32 to vector<128x32xf32>
    %10 = arith.select %8, %6, %9 : vector<128x32xi1>, vector<128x32xf32>
    %c0_2 = arith.constant 0 : index
    %c0_3 = arith.constant 0 : index
    %11 = vector.load %arg2[%c0_2, %c0_3] : memref<128x32xf32, #tpu.memory_space<vmem>>, vector<128x32xf32>
    %cst_4 = arith.constant dense<0.000000e+00> : vector<128x128xf32>
    %12 = tpu.matmul %10, %11, %cst_4 {dimension_numbers = #tpu.dot_dimension_numbers<[1], [1], [0], [0], [0, 0, 1, 0], [], []>} : vector<128x32xf32>, vector<128x32xf32>, vector<128x128xf32> -> vector<128x128xf32>
    %13 = arith.mulf %12, %12 : vector<128x128xf32>
    %14 = vector.shape_cast %13 : vector<128x128xf32> to vector<1x128x128xf32>
    %cst_5 = arith.constant dense<0.000000e+00> : vector<1xf32>
    %15 = vector.multi_reduction <add>, %14, %cst_5 [1, 2] : vector<1x128x128xf32> to vector<1xf32>
    %16 = vector.shape_cast %15 : vector<1xf32> to vector<1x1x1xf32>
    %17 = vector.extract %16[0, 0, 0] : f32 from vector<1x1x1xf32>
    %18 = arith.mulf %10, %10 : vector<128x32xf32>
    %19 = vector.shape_cast %18 : vector<128x32xf32> to vector<1x128x32xf32>
    %cst_6 = arith.constant dense<0.000000e+00> : vector<1xf32>
    %20 = vector.multi_reduction <add>, %19, %cst_6 [1, 2] : vector<1x128x32xf32> to vector<1xf32>
    %21 = vector.shape_cast %20 : vector<1xf32> to vector<1x1x1xf32>
    %22 = vector.extract %21[0, 0, 0] : f32 from vector<1x1x1xf32>
    %23 = tpu.iota {dimensions = array<i32: 2>} : vector<1x1x128xi32>
    %c0_i32 = arith.constant 0 : i32
    %24 = vector.broadcast %c0_i32 : i32 to vector<1x1x128xi32>
    %25 = arith.cmpi eq, %23, %24 : vector<1x1x128xi32>
    %c1_i32 = arith.constant 1 : i32
    %26 = vector.broadcast %c1_i32 : i32 to vector<1x1x128xi32>
    %27 = arith.cmpi eq, %23, %26 : vector<1x1x128xi32>
    %cst_7 = arith.constant 0.000000e+00 : f32
    %28 = vector.broadcast %22 : f32 to vector<1x1x128xf32>
    %29 = vector.broadcast %cst_7 : f32 to vector<1x1x128xf32>
    %30 = arith.select %27, %28, %29 : vector<1x1x128xi1>, vector<1x1x128xf32>
    %31 = vector.broadcast %17 : f32 to vector<1x1x128xf32>
    %32 = arith.select %25, %31, %30 : vector<1x1x128xi1>, vector<1x1x128xf32>
    %c0_8 = arith.constant 0 : index
    %c0_9 = arith.constant 0 : index
    %c0_10 = arith.constant 0 : index
    %33 = vector.load %arg3[%c0_8, %c0_9, %c0_10] : memref<1x1x128xf32, #tpu.memory_space<vmem>>, vector<1x1x128xf32>
    tpu.vector_store %arg3[%c0_8, %c0_9, %c0_10], %32 {strides = array<i32>} : memref<1x1x128xf32, #tpu.memory_space<vmem>>, vector<1x1x128xf32>,
    return
  }
  func.func @transform_0(%arg0: i32) -> (i32, i32) {
    %c0_i32 = arith.constant 0 : i32
    %c0_i32_0 = arith.constant 0 : i32
    return %arg0, %c0_i32 : i32, i32
  }
  func.func @transform_1(%arg0: i32) -> (i32, i32) {
    %c0_i32 = arith.constant 0 : i32
    %c0_i32_0 = arith.constant 0 : i32
    %c0_i32_1 = arith.constant 0 : i32
    return %c0_i32, %c0_i32_0 : i32, i32
  }
  func.func @transform_2(%arg0: i32) -> (i32, i32, i32) {
    %c0_i32 = arith.constant 0 : i32
    %c0_i32_0 = arith.constant 0 : i32
    %c0_i32_1 = arith.constant 0 : i32
    return %arg0, %c0_i32, %c0_i32_0 : i32, i32, i32
  }
}

</mosaic_0001>

<llo_original>
// kernel: squeeze.6
$region0: #{squeeze.6}
  %s0 = inlined_call_operand.vmem [shape: s32[16], index: 0, kind: input, shape index: {}]
  %s1 = inlined_call_operand.hbm [shape: s32[2,8], index: 1, kind: output, shape index: {}]
  $region1: #{squeeze.6} parent=0
    #allocation0 [shape = 'u8[1024]{0}', space=vmem, size = 0x400, scoped, tag = 'operand span for operand 1']
    #allocation1 [shape = 's32[1]{0}', space=sflag, size = 0x4, scoped, tag = 'scoped memory for squeeze.6']
    #allocation2 [shape = 'u8[4096]{0}', space=vmem, size = 0x1000, scoped, tag = 'scoped mem for output reshape']
    #allocation3 [shape = 'u8[4096]{0}', space=vmem, size = 0x1000, scoped, tag = 'scoped mem for input reshape']
    %2 = vsyncpa [#allocation1], 0
    %s4 = sshllo.u32 0, 1
    %v5 = vld [vmem:[%s0] sm:%s4]
    %6 = vst [vmem:[#allocation3] sm:%s4] %v5
    %v7 = vld [vmem:[#allocation3] sm:$0x1]
    %vm8 = vcmask 64512
    %9 = vst.msk [vmem:[#allocation2] sm:$0x1] %vm8, %v7
    %v10 = vld [vmem:[#allocation3] sm:$0x1]
    %11 = vrot.lane.b32.xlu0 %v10, 120
    %v12 = vpop.permute.xlu0 %11
    %vm13 = vcmask 64512
    %s14 = scalar_lea.vmem [#allocation2], 1
    %15 = vst.msk [vmem:[%s14] sm:$0x1] %vm13, %v12
    %s17 = sshllo.u32 0, 2
    %v19 = vld [vmem:[#allocation2] sm:%s17]
    %s20 = sshllo.u32 0, 2
    %21 = vst [vmem:[#allocation0] sm:%s20] %v19
    %s23 = ssub.s32 32, 32
    %24 = vsyncadd [#allocation1], %s23
    %s26 = sshll.u32 [#allocation0], 4
    %s27 = int_to_ptr.vmem [resolvable:$true] %s26
    %29 = dma.vmem_to_hbm [thread:$0]  %s27, 32, %s1, [#allocation1]
    %30 = dma.done [#allocation1], 32
    %31 = vsyncpa [#allocation1], 1

// kernel: vector_quantize_forward.2
$region0: #{vector_quantize_forward.2}
  #allocation0 [shape = 'u32[]', space=smem, size = 0x4, offset = 0x4, fixed_abs, tag = 'smem constant byte address 0x4 - core index']
  #allocation1 [shape = 'u32[144,128]{1,0:T(1,128)}', space=vmem, size = 0x12000, scoped, tag = 'internal scratch']
  %s0 = inlined_call_operand.vmem [shape: f32[16,32], index: 0, kind: input, shape index: {}]
  %s1 = inlined_call_operand.vmem [shape: f32[16,1], index: 1, kind: input, shape index: {}]
  %s2 = inlined_call_operand.vmem [shape: f32[128,32], index: 2, kind: input, shape index: {}]
  %s3 = inlined_call_operand.vmem [shape: f32[1,128], index: 3, kind: input, shape index: {}]
  %s4 = inlined_call_operand.hbm [shape: f32[16,32], index: 4, kind: output, shape index: {0}]
  %s5 = inlined_call_operand.vmem [shape: s32[16,1], index: 5, kind: output, shape index: {1}]
  %s6 = inlined_call_operand.vmem [shape: f32[1,1,128], index: 6, kind: output, shape index: {2}]
  %s7 = inlined_call_operand.vmem [shape: f32[1,1,128], index: 7, kind: output, shape index: {3}]
  %8 = xla_tuple %s4, %s5, %s6, %s7
  %s9 = sld [smem:[#allocation0]]
  $region50: #{vector_quantize_forward.2} parent=0
    _
  %s11 = ssub.s32 1, %s9
  %s12 = scalar_select 0, %s11, %s9
  $region1: #{vector_quantize_forward.2} parent=0
    #allocation2 [shape = 'u8[8192]{0}', space=vmem, size = 0x2000, scoped, tag = 'output window, operand 0, single buffered']
    #allocation3 [shape = 's32[1]{0}', space=sflag, size = 0x4, scoped, tag = 'scoped memory for vector_quantize_forward.2']
    %13 = vsyncpa [#allocation3], 0
    // Predicated region
    $region2: #{vector_quantize_forward.2} parent=1 // pred_check
      _
    $region3: #{vector_quantize_forward.2} parent=1 // pred_check_branch
      %15 = sbr.rel (0) target = $region5
    $region4: #{vector_quantize_forward.2} parent=1 // pred_region
      _
    $region5: #{vector_quantize_forward.2} parent=1 // pred_fallthru
      _
    // Predicated region
    $region6: #{vector_quantize_forward.2} parent=1 // pred_check
      _
    $region7: #{vector_quantize_forward.2} parent=1 // pred_check_branch
      %17 = sbr.rel (0) target = $region9
    $region8: #{vector_quantize_forward.2} parent=1 // pred_region
      _
    $region9: #{vector_quantize_forward.2} parent=1 // pred_fallthru
      _
    // Predicated region
    $region10: #{vector_quantize_forward.2} parent=1 // pred_check
      _
    $region11: #{vector_quantize_forward.2} parent=1 // pred_check_branch
      %19 = sbr.rel (0) target = $region13
    $region12: #{vector_quantize_forward.2} parent=1 // pred_region
      _
    $region13: #{vector_quantize_forward.2} parent=1 // pred_fallthru
      _
    // Predicated region
    $region14: #{vector_quantize_forward.2} parent=1 // pred_check
      _
    $region15: #{vector_quantize_forward.2} parent=1 // pred_check_branch
      %21 = sbr.rel (0) target = $region17
    $region16: #{vector_quantize_forward.2} parent=1 // pred_region
      _
    $region17: #{vector_quantize_forward.2} parent=1 // pred_fallthru
      _
    %s22 = smul.u32 0, 16
    %v23 = vlaneseq
    %v24 = vshrl.u32 %v23, 7
    %v25 = vadd.s32 %v24, 8
    %v26 = vstv %s22
    %v27 = vadd.s32 %v26, %v24
    %v28 = vadd.s32 %v26, %v25
    %vm29 = vcmp.lt.s32.totalorder %v27, 16
    %vm30 = vcmp.lt.s32.totalorder %v28, 16
    %v31 = vld [vmem:[%s0] sm:$0xff]
    %v32 = vld [vmem:[%s0 + $0x8] sm:$0xff]
    %v33 = vsel %vm29, 1, 0
    %v34 = vsel %vm30, 1, 0
    %vm35 = vcmp.eq.s32.totalorder %v33, 1
    %vm36 = vcmp.eq.s32.totalorder %v34, 1
    %v37 = vsel %vm35, %v31, 0.0
    %v38 = vsel %vm36, %v32, 0.0
    %v39 = vld [vmem:[%s1] sm:$0xff]
    %v40 = vld [vmem:[%s1 + $0x8] sm:$0xff]
    %v41 = vsel %vm29, %v39, 0.0
    %v42 = vsel %vm30, %v40, 0.0
    %v43 = vld [vmem:[%s2] sm:$0xff]
    %v44 = vld [vmem:[%s2 + $0x8] sm:$0xff]
    %v45 = vld [vmem:[%s2 + $0x10] sm:$0xff]
    %v46 = vld [vmem:[%s2 + $0x18] sm:$0xff]
    %v47 = vld [vmem:[%s2 + $0x20] sm:$0xff]
    %v48 = vld [vmem:[%s2 + $0x28] sm:$0xff]
    %v49 = vld [vmem:[%s2 + $0x30] sm:$0xff]
    %v50 = vld [vmem:[%s2 + $0x38] sm:$0xff]
    %v51 = vld [vmem:[%s2 + $0x40] sm:$0xff]
    %v52 = vld [vmem:[%s2 + $0x48] sm:$0xff]
    %v53 = vld [vmem:[%s2 + $0x50] sm:$0xff]
    %v54 = vld [vmem:[%s2 + $0x58] sm:$0xff]
    %v55 = vld [vmem:[%s2 + $0x60] sm:$0xff]
    %v56 = vld [vmem:[%s2 + $0x68] sm:$0xff]
    %v57 = vld [vmem:[%s2 + $0x70] sm:$0xff]
    %v58 = vld [vmem:[%s2 + $0x78] sm:$0xff]
    %v59 = vld [vmem:[%s3] sm:$0x1]
    %vm60 = vcmask 261120
    %v62 = vsel %vm60, %v37, 0
    %v65 = vsel %vm60, %v38, 0
    %v68 = vsel %vm60, %v43, 0
    %v71 = vsel %vm60, %v44, 0
    %v74 = vsel %vm60, %v45, 0
    %v77 = vsel %vm60, %v46, 0
    %v80 = vsel %vm60, %v47, 0
    %v83 = vsel %vm60, %v48, 0
    %v86 = vsel %vm60, %v49, 0
    %v89 = vsel %vm60, %v50, 0
    %v92 = vsel %vm60, %v51, 0
    %v95 = vsel %vm60, %v52, 0
    %v98 = vsel %vm60, %v53, 0
    %v101 = vsel %vm60, %v54, 0
    %v104 = vsel %vm60, %v55, 0
    %v107 = vsel %vm60, %v56, 0
    %v110 = vsel %vm60, %v57, 0
    %v113 = vsel %vm60, %v58, 0
    %115 = vmatprep.subr.mxu0 0.0
    %116 = vmatpush1.xpose.msra.mxu0 %v68
    %117 = vmatprep.subr.mxu0 0.0
    %118 = vmatpush1.xpose.msra.mxu0 %v71
    %119 = vmatprep.subr.mxu0 0.0
    %120 = vmatpush1.xpose.msra.mxu0 %v74
    %121 = vmatprep.subr.mxu0 0.0
    %122 = vmatpush1.xpose.msra.mxu0 %v77
    %123 = vmatprep.subr.mxu0 0.0
    %124 = vmatpush1.xpose.msra.mxu0 %v80
    %125 = vmatprep.subr.mxu0 0.0
    %126 = vmatpush1.xpose.msra.mxu0 %v83
    %127 = vmatprep.subr.mxu0 0.0
    %128 = vmatpush1.xpose.msra.mxu0 %v86
    %129 = vmatprep.subr.mxu0 0.0
    %130 = vmatpush1.xpose.msra.mxu0 %v89
    %131 = vmatprep.subr.mxu0 0.0
    %132 = vmatpush1.xpose.msra.mxu0 %v92
    %133 = vmatprep.subr.mxu0 0.0
    %134 = vmatpush1.xpose.msra.mxu0 %v95
    %135 = vmatprep.subr.mxu0 0.0
    %136 = vmatpush1.xpose.msra.mxu0 %v98
    %137 = vmatprep.subr.mxu0 0.0
    %138 = vmatpush1.xpose.msra.mxu0 %v101
    %139 = vmatprep.subr.mxu0 0.0
    %140 = vmatpush1.xpose.msra.mxu0 %v104
    %141 = vmatprep.subr.mxu0 0.0
    %142 = vmatpush1.xpose.msra.mxu0 %v107
    %143 = vmatprep.subr.mxu0 0.0
    %144 = vmatpush1.xpose.msra.mxu0 %v110
    %145 = vmatprep.subr.mxu0 0.0
    %146 = vmatpush1.xpose.msra.mxu0 %v113
    %147 = vmatprep.subr.mxu0 0.0
    %148 = vmatpush1.xpose.msra.mxu0 0.0
    %149 = vmatprep.subr.mxu0 0.0
    %150 = vmatpush1.xpose.msra.mxu0 0.0
    %151 = vmatprep.subr.mxu0 0.0
    %152 = vmatpush1.xpose.msra.mxu0 0.0
    %153 = vmatprep.subr.mxu0 0.0
    %154 = vmatpush1.xpose.msra.mxu0 0.0
    %155 = vmatprep.subr.mxu0 0.0
    %156 = vmatpush1.xpose.msra.mxu0 0.0
    %157 = vmatprep.subr.mxu0 0.0
    %158 = vmatpush1.xpose.msra.mxu0 0.0
    %159 = vmatprep.subr.mxu0 0.0
    %160 = vmatpush1.xpose.msra.mxu0 0.0
    %161 = vmatprep.subr.mxu0 0.0
    %162 = vmatpush1.xpose.msra.mxu0 0.0
    %163 = vmatprep.subr.mxu0 0.0
    %164 = vmatpush1.xpose.msra.mxu0 0.0
    %165 = vmatprep.subr.mxu0 0.0
    %166 = vmatpush1.xpose.msra.mxu0 0.0
    %167 = vmatprep.subr.mxu0 0.0
    %168 = vmatpush1.xpose.msra.mxu0 0.0
    %169 = vmatprep.subr.mxu0 0.0
    %170 = vmatpush1.xpose.msra.mxu0 0.0
    %171 = vmatprep.subr.mxu0 0.0
    %172 = vmatpush1.xpose.msra.mxu0 0.0
    %173 = vmatprep.subr.mxu0 0.0
    %174 = vmatpush1.xpose.msra.mxu0 0.0
    %175 = vmatprep.subr.mxu0 0.0
    %176 = vmatpush1.xpose.msra.mxu0 0.0
    %177 = vmatprep.subr.mxu0 0.0
    %178 = vmatpush1.xpose.msra.mxu0 0.0
    %179 = vmatprep.mubr.f32.mxu0 0.0
    %180 = vmatmul.mubr.f32.gmra.mrb[0].mxu0 %v62
    %v181 = vpop.f32.mrb[0].mxu0
    %v182 = vadd.f32 0.0, %v181
    %v183 = vpop.f32.mrb[0].mxu0
    %184 = vmatprep.mubr.f32.mxu0 0.0
    %185 = vmatmul.mubr.f32.gmra.mrb[0].mxu0 %v65
    %v186 = vpop.f32.mrb[0].mxu0
    %v187 = vadd.f32 0.0, %v186
    %v188 = vpop.f32.mrb[0].mxu0
    %189 = vdwg.mxu0
    %v190 = vmul.f32 %v59, 0.5
    %v192 = vlaneseq
    %v193 = vshrl.u32 %v192, 7
    %v194 = vsub.s32 0, %v193
    %v195 = vrot.slane %v190, %v194
    %v197 = vsub.f32 %v182, %v195
    %v198 = vsub.f32 %v187, %v195
    %199 = vmax.index.xlane.f32.xlu0 %v197
    %v200 = vpop.xlane.xlu0 %199
    %201 = vmax.index.xlane.f32.xlu0 %v198
    %v202 = vpop.xlane.xlu0 %201
    %vm203 = vcmask 7168
    %204 = vst.msk [vmem:[%s5] sm:$0xff] %vm203, %v200
    %205 = vst.msk [vmem:[%s5 + $0x8] sm:$0xff] %vm203, %v202
    %v206 = vlaneseq
    %v207 = vand.u32 %v206, 127
    %vm208 = vcmp.eq.s32.totalorder %v207, %v200
    %vm209 = vcmp.eq.s32.totalorder %v207, %v202
    %v210 = vsel %vm208, 1, 0
    %v211 = vsel %vm209, 1, 0
    %v212 = vcvt.s32.f32 %v210
    %v213 = vcvt.s32.f32 %v211
    %214 = vmatprep.subr.mxu0 0.0
    %215 = vmatpush1.msra.mxu0 %v43
    %216 = vmatprep.subr.mxu0 0.0
    %217 = vmatpush1.msra.mxu0 %v44
    %218 = vmatprep.subr.mxu0 0.0
    %219 = vmatpush1.msra.mxu0 %v45
    %220 = vmatprep.subr.mxu0 0.0
    %221 = vmatpush1.msra.mxu0 %v46
    %222 = vmatprep.subr.mxu0 0.0
    %223 = vmatpush1.msra.mxu0 %v47
    %224 = vmatprep.subr.mxu0 0.0
    %225 = vmatpush1.msra.mxu0 %v48
    %226 = vmatprep.subr.mxu0 0.0
    %227 = vmatpush1.msra.mxu0 %v49
    %228 = vmatprep.subr.mxu0 0.0
    %229 = vmatpush1.msra.mxu0 %v50
    %230 = vmatprep.subr.mxu0 0.0
    %231 = vmatpush1.msra.mxu0 %v51
    %232 = vmatprep.subr.mxu0 0.0
    %233 = vmatpush1.msra.mxu0 %v52
    %234 = vmatprep.subr.mxu0 0.0
    %235 = vmatpush1.msra.mxu0 %v53
    %236 = vmatprep.subr.mxu0 0.0
    %237 = vmatpush1.msra.mxu0 %v54
    %238 = vmatprep.subr.mxu0 0.0
    %239 = vmatpush1.msra.mxu0 %v55
    %240 = vmatprep.subr.mxu0 0.0
    %241 = vmatpush1.msra.mxu0 %v56
    %242 = vmatprep.subr.mxu0 0.0
    %243 = vmatpush1.msra.mxu0 %v57
    %244 = vmatprep.subr.mxu0 0.0
    %245 = vmatpush1.msra.mxu0 %v58
    %246 = vmatprep.subr.mxu0 0.0
    %247 = vmatpush1.msra.mxu0 0.0
    %248 = vmatprep.subr.mxu0 0.0
    %249 = vmatpush1.msra.mxu0 0.0
    %250 = vmatprep.subr.mxu0 0.0
    %251 = vmatpush1.msra.mxu0 0.0
    %252 = vmatprep.subr.mxu0 0.0
    %253 = vmatpush1.msra.mxu0 0.0
    %254 = vmatprep.subr.mxu0 0.0
    %255 = vmatpush1.msra.mxu0 0.0
    %256 = vmatprep.subr.mxu0 0.0
    %257 = vmatpush1.msra.mxu0 0.0
    %258 = vmatprep.subr.mxu0 0.0
    %259 = vmatpush1.msra.mxu0 0.0
    %260 = vmatprep.subr.mxu0 0.0
    %261 = vmatpush1.msra.mxu0 0.0
    %262 = vmatprep.subr.mxu0 0.0
    %263 = vmatpush1.msra.mxu0 0.0
    %264 = vmatprep.subr.mxu0 0.0
    %265 = vmatpush1.msra.mxu0 0.0
    %266 = vmatprep.subr.mxu0 0.0
    %267 = vmatpush1.msra.mxu0 0.0
    %268 = vmatprep.subr.mxu0 0.0
    %269 = vmatpush1.msra.mxu0 0.0
    %270 = vmatprep.subr.mxu0 0.0
    %271 = vmatpush1.msra.mxu0 0.0
    %272 = vmatprep.subr.mxu0 0.0
    %273 = vmatpush1.msra.mxu0 0.0
    %274 = vmatprep.subr.mxu0 0.0
    %275 = vmatpush1.msra.mxu0 0.0
    %276 = vmatprep.subr.mxu0 0.0
    %277 = vmatpush1.msra.mxu0 0.0
    %278 = vmatprep.mubr.f32.mxu0 0.0
    %279 = vmatmul.mubr.f32.gmra.mrb[0].mxu0 %v212
    %v280 = vpop.f32.mrb[0].mxu0
    %v281 = vadd.f32 0.0, %v280
    %v282 = vpop.f32.mrb[0].mxu0
    %283 = vmatprep.mubr.f32.mxu0 0.0
    %284 = vmatmul.mubr.f32.gmra.mrb[0].mxu0 %v213
    %v285 = vpop.f32.mrb[0].mxu0
    %v286 = vadd.f32 0.0, %v285
    %v287 = vpop.f32.mrb[0].mxu0
    %288 = vdwg.mxu0
    %289 = vst.msk [vmem:[#allocation2] sm:$0xff] %vm60, %v281
    %290 = vst.msk [vmem:[#allocation2 + $0x8] sm:$0xff] %vm60, %v286
    %292 = vset.pattern.permute.xlu0 0
    %293 = vperm.xlu0 %292, %v41
    %v294 = vpop.permute.xlu0 %293
    %297 = vset.pattern.permute.xlu0 0
    %298 = vperm.xlu0 %297, %v42
    %v299 = vpop.permute.xlu0 %298
    %v301 = vmul.f32 %v212, %v294
    %v302 = vmul.f32 %v213, %v299
    %v303 = vadd.f32 %v301, %v302
    %v304 = vrot.slane %v303, 4
    %v305 = vadd.f32 %v303, %v304
    %v306 = vrot.slane %v305, 2
    %v307 = vadd.f32 %v305, %v306
    %v308 = vrot.slane %v307, 1
    %v309 = vadd.f32 %v307, %v308
    %310 = vst [vmem:[%s6] sm:$0x1] %v309
    %v311 = vsub.f32 %v37, %v281
    %v312 = vsub.f32 %v38, %v286
    %v313 = vmul.f32 %v311, %v311
    %v314 = vmul.f32 %v312, %v312
    %v315 = vsel %vm60, %v313, 0.0
    %316 = vadd.xlane.f32.xlu0 %v315
    %v317 = vpop.xlane.xlu0 %316
    %v318 = vsel %vm60, %v314, 0.0
    %319 = vadd.xlane.f32.xlu0 %v318
    %v320 = vpop.xlane.xlu0 %319
    %v321 = vmul.f32 %v317, %v41
    %v322 = vmul.f32 %v320, %v42
    %v323 = vsel %vm203, %v321, 0.0
    %v324 = vsel %vm203, %v322, 0.0
    %v325 = vadd.f32 %v323, %v324
    %326 = vadd.xlane.f32.xlu0 %v325
    %v327 = vpop.xlane.xlu0 %326
    %v328 = vrot.slane %v327, 4
    %v329 = vadd.f32 %v327, %v328
    %v330 = vrot.slane %v329, 2
    %v331 = vadd.f32 %v329, %v330
    %v332 = vrot.slane %v331, 1
    %v333 = vadd.f32 %v331, %v332
    %s334 = vtos %v333
    %v335 = vsel %vm203, %v41, 0.0
    %v336 = vsel %vm203, %v42, 0.0
    %v337 = vadd.f32 %v335, %v336
    %338 = vadd.xlane.f32.xlu0 %v337
    %v339 = vpop.xlane.xlu0 %338
    %v340 = vrot.slane %v339, 4
    %v341 = vadd.f32 %v339, %v340
    %v342 = vrot.slane %v341, 2
    %v343 = vadd.f32 %v341, %v342
    %v344 = vrot.slane %v343, 1
    %v345 = vadd.f32 %v343, %v344
    %s346 = vtos %v345
    %vm347 = vcmp.eq.s32.totalorder %v207, 0
    %vm348 = vcmp.eq.s32.totalorder %v207, 1
    %v349 = vstv %s346
    %v350 = vsel %vm348, %v349, 0.0
    %v351 = vstv %s334
    %v352 = vsel %vm347, %v351, %v350
    %353 = vst [vmem:[%s7] sm:$0x1] %v352
    // Predicated region
    $region18: #{vector_quantize_forward.2} parent=1 // pred_check
      _
    $region19: #{vector_quantize_forward.2} parent=1 // pred_check_branch
      %355 = sbr.rel (0) target = $region21
    $region20: #{vector_quantize_forward.2} parent=1 // pred_region
      %s357 = ssub.s32 256, 256
      %358 = vsyncadd [#allocation3], %s357
      %s359 = sshll.u32 [#allocation2], 4
      %s360 = int_to_ptr.vmem [resolvable:$true] %s359
      %365 = dma.vmem_to_hbm [thread:$0]  %s360, 256, %s4, [#allocation3], 128, 128, 8
    $region21: #{vector_quantize_forward.2} parent=1 // pred_fallthru
      _
    // Predicated region
    $region22: #{vector_quantize_forward.2} parent=1 // pred_check
      _
    $region23: #{vector_quantize_forward.2} parent=1 // pred_check_branch
      %367 = sbr.rel (0) target = $region25
    $region24: #{vector_quantize_forward.2} parent=1 // pred_region
      _
    $region25: #{vector_quantize_forward.2} parent=1 // pred_fallthru
      _
    // Predicated region
    $region26: #{vector_quantize_forward.2} parent=1 // pred_check
      _
    $region27: #{vector_quantize_forward.2} parent=1 // pred_check_branch
      %369 = sbr.rel (0) target = $region29
    $region28: #{vector_quantize_forward.2} parent=1 // pred_region
      _
    $region29: #{vector_quantize_forward.2} parent=1 // pred_fallthru
      _
    // Predicated region
    $region30: #{vector_quantize_forward.2} parent=1 // pred_check
      _
    $region31: #{vector_quantize_forward.2} parent=1 // pred_check_branch
      %371 = sbr.rel (0) target = $region33
    $region32: #{vector_quantize_forward.2} parent=1 // pred_region
      _
    $region33: #{vector_quantize_forward.2} parent=1 // pred_fallthru
      _
    // Predicated region
    $region34: #{vector_quantize_forward.2} parent=1 // pred_check
      _
    $region35: #{vector_quantize_forward.2} parent=1 // pred_check_branch
      %373 = sbr.rel (0) target = $region37
    $region36: #{vector_quantize_forward.2} parent=1 // pred_region
      %374 = dma.done [#allocation3], 256
    $region37: #{vector_quantize_forward.2} parent=1 // pred_fallthru
      _
    // Predicated region
    $region38: #{vector_quantize_forward.2} parent=1 // pred_check
      _
    $region39: #{vector_quantize_forward.2} parent=1 // pred_check_branch
      %376 = sbr.rel (0) target = $region41
    $region40: #{vector_quantize_forward.2} parent=1 // pred_region
      _
    $region41: #{vector_quantize_forward.2} parent=1 // pred_fallthru
      _
    // Predicated region
    $region42: #{vector_quantize_forward.2} parent=1 // pred_check
      _
    $region43: #{vector_quantize_forward.2} parent=1 // pred_check_branch
      %378 = sbr.rel (0) target = $region45
    $region44: #{vector_quantize_forward.2} parent=1 // pred_region
      _
    $region45: #{vector_quantize_forward.2} parent=1 // pred_fallthru
      _
    // Predicated region
    $region46: #{vector_quantize_forward.2} parent=1 // pred_check
      _
    $region47: #{vector_quantize_forward.2} parent=1 // pred_check_branch
      %380 = sbr.rel (0) target = $region49
    $region48: #{vector_quantize_forward.2} parent=1 // pred_region
      _
    $region49: #{vector_quantize_forward.2} parent=1 // pred_fallthru
      _
    %381 = vsyncpa [#allocation3], 1

// kernel: vector_quantize_forward.3
$region0: #{vector_quantize_forward.3}
  #allocation0 [shape = 'u32[]', space=smem, size = 0x4, offset = 0x4, fixed_abs, tag = 'smem constant byte address 0x4 - core index']
  #allocation1 [shape = 'u32[144,128]{1,0:T(1,128)}', space=vmem, size = 0x12000, scoped, tag = 'internal scratch']
  %s0 = inlined_call_operand.vmem [shape: f32[128,32], index: 0, kind: input, shape index: {}, may-alias: {0,1}]
  %s1 = inlined_call_operand.vmem [shape: f32[128,32], index: 1, kind: input, shape index: {}, may-alias: {0,1}]
  %s2 = inlined_call_operand.vmem [shape: f32[1,1,128], index: 2, kind: output, shape index: {}]
  %s3 = sld [smem:[#allocation0]]
  $region18: #{vector_quantize_forward.3} parent=0
    _
  %s5 = ssub.s32 1, %s3
  %s6 = scalar_select 0, %s5, %s3
  // Predicated region
  $region2: #{vector_quantize_forward.3} parent=0 // pred_check
    _
  $region3: #{vector_quantize_forward.3} parent=0 // pred_check_branch
    %8 = sbr.rel (0) target = $region5
  $region4: #{vector_quantize_forward.3} parent=0 // pred_region
    _
  $region5: #{vector_quantize_forward.3} parent=0 // pred_fallthru
    _
  // Predicated region
  $region6: #{vector_quantize_forward.3} parent=0 // pred_check
    _
  $region7: #{vector_quantize_forward.3} parent=0 // pred_check_branch
    %10 = sbr.rel (0) target = $region9
  $region8: #{vector_quantize_forward.3} parent=0 // pred_region
    _
  $region9: #{vector_quantize_forward.3} parent=0 // pred_fallthru
    _
  %s11 = smul.u32 0, 128
  %v12 = vlaneseq
  %v13 = vshrl.u32 %v12, 7
  %v14 = vadd.s32 %v13, 8
  %v15 = vadd.s32 %v13, 16
  %v16 = vadd.s32 %v13, 24
  %v17 = vadd.s32 %v13, 32
  %v18 = vadd.s32 %v13, 40
  %v19 = vadd.s32 %v13, 48
  %v20 = vadd.s32 %v13, 56
  %v21 = vadd.s32 %v13, 64
  %v22 = vadd.s32 %v13, 72
  %v23 = vadd.s32 %v13, 80
  %v24 = vadd.s32 %v13, 88
  %v25 = vadd.s32 %v13, 96
  %v26 = vadd.s32 %v13, 104
  %v27 = vadd.s32 %v13, 112
  %v28 = vadd.s32 %v13, 120
  %v29 = vstv %s11
  %v30 = vadd.s32 %v29, %v13
  %v31 = vadd.s32 %v29, %v14
  %v32 = vadd.s32 %v29, %v15
  %v33 = vadd.s32 %v29, %v16
  %v34 = vadd.s32 %v29, %v17
  %v35 = vadd.s32 %v29, %v18
  %v36 = vadd.s32 %v29, %v19
  %v37 = vadd.s32 %v29, %v20
  %v38 = vadd.s32 %v29, %v21
  %v39 = vadd.s32 %v29, %v22
  %v40 = vadd.s32 %v29, %v23
  %v41 = vadd.s32 %v29, %v24
  %v42 = vadd.s32 %v29, %v25
  %v43 = vadd.s32 %v29, %v26
  %v44 = vadd.s32 %v29, %v27
  %v45 = vadd.s32 %v29, %v28
  %vm46 = vcmp.lt.s32.totalorder %v30, 128
  %vm47 = vcmp.lt.s32.totalorder %v31, 128
  %vm48 = vcmp.lt.s32.totalorder %v32, 128
  %vm49 = vcmp.lt.s32.totalorder %v33, 128
  %vm50 = vcmp.lt.s32.totalorder %v34, 128
  %vm51 = vcmp.lt.s32.totalorder %v35, 128
  %vm52 = vcmp.lt.s32.totalorder %v36, 128
  %vm53 = vcmp.lt.s32.totalorder %v37, 128
  %vm54 = vcmp.lt.s32.totalorder %v38, 128
  %vm55 = vcmp.lt.s32.totalorder %v39, 128
  %vm56 = vcmp.lt.s32.totalorder %v40, 128
  %vm57 = vcmp.lt.s32.totalorder %v41, 128
  %vm58 = vcmp.lt.s32.totalorder %v42, 128
  %vm59 = vcmp.lt.s32.totalorder %v43, 128
  %vm60 = vcmp.lt.s32.totalorder %v44, 128
  %vm61 = vcmp.lt.s32.totalorder %v45, 128
  %v62 = vld [vmem:[%s0] sm:$0xff]
  %v63 = vld [vmem:[%s0 + $0x8] sm:$0xff]
  %v64 = vld [vmem:[%s0 + $0x10] sm:$0xff]
  %v65 = vld [vmem:[%s0 + $0x18] sm:$0xff]
  %v66 = vld [vmem:[%s0 + $0x20] sm:$0xff]
  %v67 = vld [vmem:[%s0 + $0x28] sm:$0xff]
  %v68 = vld [vmem:[%s0 + $0x30] sm:$0xff]
  %v69 = vld [vmem:[%s0 + $0x38] sm:$0xff]
  %v70 = vld [vmem:[%s0 + $0x40] sm:$0xff]
  %v71 = vld [vmem:[%s0 + $0x48] sm:$0xff]
  %v72 = vld [vmem:[%s0 + $0x50] sm:$0xff]
  %v73 = vld [vmem:[%s0 + $0x58] sm:$0xff]
  %v74 = vld [vmem:[%s0 + $0x60] sm:$0xff]
  %v75 = vld [vmem:[%s0 + $0x68] sm:$0xff]
  %v76 = vld [vmem:[%s0 + $0x70] sm:$0xff]
  %v77 = vld [vmem:[%s0 + $0x78] sm:$0xff]
  %v78 = vsel %vm46, 1, 0
  %v79 = vsel %vm47, 1, 0
  %v80 = vsel %vm48, 1, 0
  %v81 = vsel %vm49, 1, 0
  %v82 = vsel %vm50, 1, 0
  %v83 = vsel %vm51, 1, 0
  %v84 = vsel %vm52, 1, 0
  %v85 = vsel %vm53, 1, 0
  %v86 = vsel %vm54, 1, 0
  %v87 = vsel %vm55, 1, 0
  %v88 = vsel %vm56, 1, 0
  %v89 = vsel %vm57, 1, 0
  %v90 = vsel %vm58, 1, 0
  %v91 = vsel %vm59, 1, 0
  %v92 = vsel %vm60, 1, 0
  %v93 = vsel %vm61, 1, 0
  %vm94 = vcmp.eq.s32.totalorder %v78, 1
  %vm95 = vcmp.eq.s32.totalorder %v79, 1
  %vm96 = vcmp.eq.s32.totalorder %v80, 1
  %vm97 = vcmp.eq.s32.totalorder %v81, 1
  %vm98 = vcmp.eq.s32.totalorder %v82, 1
  %vm99 = vcmp.eq.s32.totalorder %v83, 1
  %vm100 = vcmp.eq.s32.totalorder %v84, 1
  %vm101 = vcmp.eq.s32.totalorder %v85, 1
  %vm102 = vcmp.eq.s32.totalorder %v86, 1
  %vm103 = vcmp.eq.s32.totalorder %v87, 1
  %vm104 = vcmp.eq.s32.totalorder %v88, 1
  %vm105 = vcmp.eq.s32.totalorder %v89, 1
  %vm106 = vcmp.eq.s32.totalorder %v90, 1
  %vm107 = vcmp.eq.s32.totalorder %v91, 1
  %vm108 = vcmp.eq.s32.totalorder %v92, 1
  %vm109 = vcmp.eq.s32.totalorder %v93, 1
  %v110 = vsel %vm94, %v62, 0.0
  %v111 = vsel %vm95, %v63, 0.0
  %v112 = vsel %vm96, %v64, 0.0
  %v113 = vsel %vm97, %v65, 0.0
  %v114 = vsel %vm98, %v66, 0.0
  %v115 = vsel %vm99, %v67, 0.0
  %v116 = vsel %vm100, %v68, 0.0
  %v117 = vsel %vm101, %v69, 0.0
  %v118 = vsel %vm102, %v70, 0.0
  %v119 = vsel %vm103, %v71, 0.0
  %v120 = vsel %vm104, %v72, 0.0
  %v121 = vsel %vm105, %v73, 0.0
  %v122 = vsel %vm106, %v74, 0.0
  %v123 = vsel %vm107, %v75, 0.0
  %v124 = vsel %vm108, %v76, 0.0
  %v125 = vsel %vm109, %v77, 0.0
  %v126 = vld [vmem:[%s1] sm:$0xff]
  %v127 = vld [vmem:[%s1 + $0x8] sm:$0xff]
  %v128 = vld [vmem:[%s1 + $0x10] sm:$0xff]
  %v129 = vld [vmem:[%s1 + $0x18] sm:$0xff]
  %v130 = vld [vmem:[%s1 + $0x20] sm:$0xff]
  %v131 = vld [vmem:[%s1 + $0x28] sm:$0xff]
  %v132 = vld [vmem:[%s1 + $0x30] sm:$0xff]
  %v133 = vld [vmem:[%s1 + $0x38] sm:$0xff]
  %v134 = vld [vmem:[%s1 + $0x40] sm:$0xff]
  %v135 = vld [vmem:[%s1 + $0x48] sm:$0xff]
  %v136 = vld [vmem:[%s1 + $0x50] sm:$0xff]
  %v137 = vld [vmem:[%s1 + $0x58] sm:$0xff]
  %v138 = vld [vmem:[%s1 + $0x60] sm:$0xff]
  %v139 = vld [vmem:[%s1 + $0x68] sm:$0xff]
  %v140 = vld [vmem:[%s1 + $0x70] sm:$0xff]
  %v141 = vld [vmem:[%s1 + $0x78] sm:$0xff]
  %vm142 = vcmask 261120
  %v144 = vsel %vm142, %v110, 0
  %v147 = vsel %vm142, %v111, 0
  %v150 = vsel %vm142, %v112, 0
  %v153 = vsel %vm142, %v113, 0
  %v156 = vsel %vm142, %v114, 0
  %v159 = vsel %vm142, %v115, 0
  %v162 = vsel %vm142, %v116, 0
  %v165 = vsel %vm142, %v117, 0
  %v168 = vsel %vm142, %v118, 0
  %v171 = vsel %vm142, %v119, 0
  %v174 = vsel %vm142, %v120, 0
  %v177 = vsel %vm142, %v121, 0
  %v180 = vsel %vm142, %v122, 0
  %v183 = vsel %vm142, %v123, 0
  %v186 = vsel %vm142, %v124, 0
  %v189 = vsel %vm142, %v125, 0
  %v192 = vsel %vm142, %v126, 0
  %v195 = vsel %vm142, %v127, 0
  %v198 = vsel %vm142, %v128, 0
  %v201 = vsel %vm142, %v129, 0
  %v204 = vsel %vm142, %v130, 0
  %v207 = vsel %vm142, %v131, 0
  %v210 = vsel %vm142, %v132, 0
  %v213 = vsel %vm142, %v133, 0
  %v216 = vsel %vm142, %v134, 0
  %v219 = vsel %vm142, %v135, 0
  %v222 = vsel %vm142, %v136, 0
  %v225 = vsel %vm142, %v137, 0
  %v228 = vsel %vm142, %v138, 0
  %v231 = vsel %vm142, %v139, 0
  %v234 = vsel %vm142, %v140, 0
  %v237 = vsel %vm142, %v141, 0
  %239 = vmatprep.subr.mxu0 0.0
  %240 = vmatpush1.xpose.msra.mxu0 %v192
  %241 = vmatprep.subr.mxu0 0.0
  %242 = vmatpush1.xpose.msra.mxu0 %v195
  %243 = vmatprep.subr.mxu0 0.0
  %244 = vmatpush1.xpose.msra.mxu0 %v198
  %245 = vmatprep.subr.mxu0 0.0
  %246 = vmatpush1.xpose.msra.mxu0 %v201
  %247 = vmatprep.subr.mxu0 0.0
  %248 = vmatpush1.xpose.msra.mxu0 %v204
  %249 = vmatprep.subr.mxu0 0.0
  %250 = vmatpush1.xpose.msra.mxu0 %v207
  %251 = vmatprep.subr.mxu0 0.0
  %252 = vmatpush1.xpose.msra.mxu0 %v210
  %253 = vmatprep.subr.mxu0 0.0
  %254 = vmatpush1.xpose.msra.mxu0 %v213
  %255 = vmatprep.subr.mxu0 0.0
  %256 = vmatpush1.xpose.msra.mxu0 %v216
  %257 = vmatprep.subr.mxu0 0.0
  %258 = vmatpush1.xpose.msra.mxu0 %v219
  %259 = vmatprep.subr.mxu0 0.0
  %260 = vmatpush1.xpose.msra.mxu0 %v222
  %261 = vmatprep.subr.mxu0 0.0
  %262 = vmatpush1.xpose.msra.mxu0 %v225
  %263 = vmatprep.subr.mxu0 0.0
  %264 = vmatpush1.xpose.msra.mxu0 %v228
  %265 = vmatprep.subr.mxu0 0.0
  %266 = vmatpush1.xpose.msra.mxu0 %v231
  %267 = vmatprep.subr.mxu0 0.0
  %268 = vmatpush1.xpose.msra.mxu0 %v234
  %269 = vmatprep.subr.mxu0 0.0
  %270 = vmatpush1.xpose.msra.mxu0 %v237
  %271 = vmatprep.subr.mxu0 0.0
  %272 = vmatpush1.xpose.msra.mxu0 0.0
  %273 = vmatprep.subr.mxu0 0.0
  %274 = vmatpush1.xpose.msra.mxu0 0.0
  %275 = vmatprep.subr.mxu0 0.0
  %276 = vmatpush1.xpose.msra.mxu0 0.0
  %277 = vmatprep.subr.mxu0 0.0
  %278 = vmatpush1.xpose.msra.mxu0 0.0
  %279 = vmatprep.subr.mxu0 0.0
  %280 = vmatpush1.xpose.msra.mxu0 0.0
  %281 = vmatprep.subr.mxu0 0.0
  %282 = vmatpush1.xpose.msra.mxu0 0.0
  %283 = vmatprep.subr.mxu0 0.0
  %284 = vmatpush1.xpose.msra.mxu0 0.0
  %285 = vmatprep.subr.mxu0 0.0
  %286 = vmatpush1.xpose.msra.mxu0 0.0
  %287 = vmatprep.subr.mxu0 0.0
  %288 = vmatpush1.xpose.msra.mxu0 0.0
  %289 = vmatprep.subr.mxu0 0.0
  %290 = vmatpush1.xpose.msra.mxu0 0.0
  %291 = vmatprep.subr.mxu0 0.0
  %292 = vmatpush1.xpose.msra.mxu0 0.0
  %293 = vmatprep.subr.mxu0 0.0
  %294 = vmatpush1.xpose.msra.mxu0 0.0
  %295 = vmatprep.subr.mxu0 0.0
  %296 = vmatpush1.xpose.msra.mxu0 0.0
  %297 = vmatprep.subr.mxu0 0.0
  %298 = vmatpush1.xpose.msra.mxu0 0.0
  %299 = vmatprep.subr.mxu0 0.0
  %300 = vmatpush1.xpose.msra.mxu0 0.0
  %301 = vmatprep.subr.mxu0 0.0
  %302 = vmatpush1.xpose.msra.mxu0 0.0
  %303 = vmatprep.mubr.f32.mxu0 0.0
  %304 = vmatmul.mubr.f32.gmra.mrb[0].mxu0 %v144
  %v305 = vpop.f32.mrb[0].mxu0
  %v306 = vadd.f32 0.0, %v305
  %v307 = vpop.f32.mrb[0].mxu0
  %308 = vmatprep.mubr.f32.mxu0 0.0
  %309 = vmatmul.mubr.f32.gmra.mrb[0].mxu0 %v147
  %v310 = vpop.f32.mrb[0].mxu0
  %v311 = vadd.f32 0.0, %v310
  %v312 = vpop.f32.mrb[0].mxu0
  %313 = vmatprep.mubr.f32.mxu0 0.0
  %314 = vmatmul.mubr.f32.gmra.mrb[0].mxu0 %v150
  %v315 = vpop.f32.mrb[0].mxu0
  %v316 = vadd.f32 0.0, %v315
  %v317 = vpop.f32.mrb[0].mxu0
  %318 = vmatprep.mubr.f32.mxu0 0.0
  %319 = vmatmul.mubr.f32.gmra.mrb[0].mxu0 %v153
  %v320 = vpop.f32.mrb[0].mxu0
  %v321 = vadd.f32 0.0, %v320
  %v322 = vpop.f32.mrb[0].mxu0
  %323 = vmatprep.mubr.f32.mxu0 0.0
  %324 = vmatmul.mubr.f32.gmra.mrb[0].mxu0 %v156
  %v325 = vpop.f32.mrb[0].mxu0
  %v326 = vadd.f32 0.0, %v325
  %v327 = vpop.f32.mrb[0].mxu0
  %328 = vmatprep.mubr.f32.mxu0 0.0
  %329 = vmatmul.mubr.f32.gmra.mrb[0].mxu0 %v159
  %v330 = vpop.f32.mrb[0].mxu0
  %v331 = vadd.f32 0.0, %v330
  %v332 = vpop.f32.mrb[0].mxu0
  %333 = vmatprep.mubr.f32.mxu0 0.0
  %334 = vmatmul.mubr.f32.gmra.mrb[0].mxu0 %v162
  %v335 = vpop.f32.mrb[0].mxu0
  %v336 = vadd.f32 0.0, %v335
  %v337 = vpop.f32.mrb[0].mxu0
  %338 = vmatprep.mubr.f32.mxu0 0.0
  %339 = vmatmul.mubr.f32.gmra.mrb[0].mxu0 %v165
  %v340 = vpop.f32.mrb[0].mxu0
  %v341 = vadd.f32 0.0, %v340
  %v342 = vpop.f32.mrb[0].mxu0
  %343 = vmatprep.mubr.f32.mxu0 0.0
  %344 = vmatmul.mubr.f32.gmra.mrb[0].mxu0 %v168
  %v345 = vpop.f32.mrb[0].mxu0
  %v346 = vadd.f32 0.0, %v345
  %v347 = vpop.f32.mrb[0].mxu0
  %348 = vmatprep.mubr.f32.mxu0 0.0
  %349 = vmatmul.mubr.f32.gmra.mrb[0].mxu0 %v171
  %v350 = vpop.f32.mrb[0].mxu0
  %v351 = vadd.f32 0.0, %v350
  %v352 = vpop.f32.mrb[0].mxu0
  %353 = vmatprep.mubr.f32.mxu0 0.0
  %354 = vmatmul.mubr.f32.gmra.mrb[0].mxu0 %v174
  %v355 = vpop.f32.mrb[0].mxu0
  %v356 = vadd.f32 0.0, %v355
  %v357 = vpop.f32.mrb[0].mxu0
  %358 = vmatprep.mubr.f32.mxu0 0.0
  %359 = vmatmul.mubr.f32.gmra.mrb[0].mxu0 %v177
  %v360 = vpop.f32.mrb[0].mxu0
  %v361 = vadd.f32 0.0, %v360
  %v362 = vpop.f32.mrb[0].mxu0
  %363 = vmatprep.mubr.f32.mxu0 0.0
  %364 = vmatmul.mubr.f32.gmra.mrb[0].mxu0 %v180
  %v365 = vpop.f32.mrb[0].mxu0
  %v366 = vadd.f32 0.0, %v365
  %v367 = vpop.f32.mrb[0].mxu0
  %368 = vmatprep.mubr.f32.mxu0 0.0
  %369 = vmatmul.mubr.f32.gmra.mrb[0].mxu0 %v183
  %v370 = vpop.f32.mrb[0].mxu0
  %v371 = vadd.f32 0.0, %v370
  %v372 = vpop.f32.mrb[0].mxu0
  %373 = vmatprep.mubr.f32.mxu0 0.0
  %374 = vmatmul.mubr.f32.gmra.mrb[0].mxu0 %v186
  %v375 = vpop.f32.mrb[0].mxu0
  %v376 = vadd.f32 0.0, %v375
  %v377 = vpop.f32.mrb[0].mxu0
  %378 = vmatprep.mubr.f32.mxu0 0.0
  %379 = vmatmul.mubr.f32.gmra.mrb[0].mxu0 %v189
  %v380 = vpop.f32.mrb[0].mxu0
  %v381 = vadd.f32 0.0, %v380
  %v382 = vpop.f32.mrb[0].mxu0
  %383 = vdwg.mxu0
  %v384 = vmul.f32 %v306, %v306
  %v385 = vmul.f32 %v311, %v311
  %v386 = vmul.f32 %v316, %v316
  %v387 = vmul.f32 %v321, %v321
  %v388 = vmul.f32 %v326, %v326
  %v389 = vmul.f32 %v331, %v331
  %v390 = vmul.f32 %v336, %v336
  %v391 = vmul.f32 %v341, %v341
  %v392 = vmul.f32 %v346, %v346
  %v393 = vmul.f32 %v351, %v351
  %v394 = vmul.f32 %v356, %v356
  %v395 = vmul.f32 %v361, %v361
  %v396 = vmul.f32 %v366, %v366
  %v397 = vmul.f32 %v371, %v371
  %v398 = vmul.f32 %v376, %v376
  %v399 = vmul.f32 %v381, %v381
  %v400 = vadd.f32 %v384, %v385
  %v401 = vadd.f32 %v400, %v386
  %v402 = vadd.f32 %v401, %v387
  %v403 = vadd.f32 %v402, %v388
  %v404 = vadd.f32 %v403, %v389
  %v405 = vadd.f32 %v404, %v390
  %v406 = vadd.f32 %v405, %v391
  %v407 = vadd.f32 %v406, %v392
  %v408 = vadd.f32 %v407, %v393
  %v409 = vadd.f32 %v408, %v394
  %v410 = vadd.f32 %v409, %v395
  %v411 = vadd.f32 %v410, %v396
  %v412 = vadd.f32 %v411, %v397
  %v413 = vadd.f32 %v412, %v398
  %v414 = vadd.f32 %v413, %v399
  %415 = vadd.xlane.f32.xlu0 %v414
  %v416 = vpop.xlane.xlu0 %415
  %v417 = vrot.slane %v416, 4
  %v418 = vadd.f32 %v416, %v417
  %v419 = vrot.slane %v418, 2
  %v420 = vadd.f32 %v418, %v419
  %v421 = vrot.slane %v420, 1
  %v422 = vadd.f32 %v420, %v421
  %s423 = vtos %v422
  %v424 = vmul.f32 %v110, %v110
  %v425 = vmul.f32 %v111, %v111
  %v426 = vmul.f32 %v112, %v112
  %v427 = vmul.f32 %v113, %v113
  %v428 = vmul.f32 %v114, %v114
  %v429 = vmul.f32 %v115, %v115
  %v430 = vmul.f32 %v116, %v116
  %v431 = vmul.f32 %v117, %v117
  %v432 = vmul.f32 %v118, %v118
  %v433 = vmul.f32 %v119, %v119
  %v434 = vmul.f32 %v120, %v120
  %v435 = vmul.f32 %v121, %v121
  %v436 = vmul.f32 %v122, %v122
  %v437 = vmul.f32 %v123, %v123
  %v438 = vmul.f32 %v124, %v124
  %v439 = vmul.f32 %v125, %v125
  %v440 = vsel %vm142, %v424, 0.0
  %v441 = vsel %vm142, %v425, 0.0
  %v442 = vadd.f32 %v440, %v441
  %v443 = vsel %vm142, %v426, 0.0
  %v444 = vadd.f32 %v442, %v443
  %v445 = vsel %vm142, %v427, 0.0
  %v446 = vadd.f32 %v444, %v445
  %v447 = vsel %vm142, %v428, 0.0
  %v448 = vadd.f32 %v446, %v447
  %v449 = vsel %vm142, %v429, 0.0
  %v450 = vadd.f32 %v448, %v449
  %v451 = vsel %vm142, %v430, 0.0
  %v452 = vadd.f32 %v450, %v451
  %v453 = vsel %vm142, %v431, 0.0
  %v454 = vadd.f32 %v452, %v453
  %v455 = vsel %vm142, %v432, 0.0
  %v456 = vadd.f32 %v454, %v455
  %v457 = vsel %vm142, %v433, 0.0
  %v458 = vadd.f32 %v456, %v457
  %v459 = vsel %vm142, %v434, 0.0
  %v460 = vadd.f32 %v458, %v459
  %v461 = vsel %vm142, %v435, 0.0
  %v462 = vadd.f32 %v460, %v461
  %v463 = vsel %vm142, %v436, 0.0
  %v464 = vadd.f32 %v462, %v463
  %v465 = vsel %vm142, %v437, 0.0
  %v466 = vadd.f32 %v464, %v465
  %v467 = vsel %vm142, %v438, 0.0
  %v468 = vadd.f32 %v466, %v467
  %v469 = vsel %vm142, %v439, 0.0
  %v470 = vadd.f32 %v468, %v469
  %471 = vadd.xlane.f32.xlu0 %v470
  %v472 = vpop.xlane.xlu0 %471
  %v473 = vrot.slane %v472, 4
  %v474 = vadd.f32 %v472, %v473
  %v475 = vrot.slane %v474, 2
  %v476 = vadd.f32 %v474, %v475
  %v477 = vrot.slane %v476, 1
  %v478 = vadd.f32 %v476, %v477
  %s479 = vtos %v478
  %v480 = vlaneseq
  %v481 = vand.u32 %v480, 127
  %vm482 = vcmp.eq.s32.totalorder %v481, 0
  %vm483 = vcmp.eq.s32.totalorder %v481, 1
  %v484 = vstv %s479
  %v485 = vsel %vm483, %v484, 0.0
  %v486 = vstv %s423
  %v487 = vsel %vm482, %v486, %v485
  %488 = vst [vmem:[%s2] sm:$0x1] %v487
  // Predicated region
  $region10: #{vector_quantize_forward.3} parent=0 // pred_check
    _
  $region11: #{vector_quantize_forward.3} parent=0 // pred_check_branch
    %490 = sbr.rel (0) target = $region13
  $region12: #{vector_quantize_forward.3} parent=0 // pred_region
    _
  $region13: #{vector_quantize_forward.3} parent=0 // pred_fallthru
    _
  // Predicated region
  $region14: #{vector_quantize_forward.3} parent=0 // pred_check
    _
  $region15: #{vector_quantize_forward.3} parent=0 // pred_check_branch
    %492 = sbr.rel (0) target = $region17
  $region16: #{vector_quantize_forward.3} parent=0 // pred_region
    _
  $region17: #{vector_quantize_forward.3} parent=0 // pred_fallthru
    _

</llo_original>
